<compile_context>
chip_gen: v6e
topology: v6e:2x2x1
jax: 0.10.0
libtpu: 0.0.40
codegen_flags: <defaults>
</compile_context>

<pallas_src>
import jax
import jax.numpy as jnp
from jax import lax
from jax.experimental import pallas as pl
from jax.experimental.pallas import tpu as pltpu

# ---- small synthetic shapes consistent with the module's forward ----
B = 8            # batch of embeddings
FEAT = 32        # in_features
NCLASSES = 200   # out_features (not a multiple of 128 -> exercises padding)
TILE_N = 128     # class tile (lane-dense)

ARC_S = 64.0     # ElasticArcFace default s
ARC_M = 0.5      # ElasticArcFace default m
ARC_STD = 0.0125 # ElasticArcFace default std
EPS = 1e-12      # l2-norm guard


def elastic_arcface_kernel(emb_ref, w_ref, meta_ref, out_ref):
    j = pl.program_id(0)                                   # class-tile index

    # ---- l2_norm(embeddings, axis=1) (recomputed per tile; B*F is tiny) ----
    emb = emb_ref[...]                                     # (B, F) f32
    emb = emb * lax.rsqrt(jnp.sum(emb * emb, axis=1, keepdims=True) + EPS)

    # ---- l2_norm(kernel, axis=0), per class tile ----
    w = w_ref[...]                                         # (F, TILE_N) f32
    wn = w * lax.rsqrt(jnp.sum(w * w, axis=0, keepdims=True) + EPS)

    # ---- cos_theta = emb @ kernel_norm, clamp(-1, 1) ----
    cos_t = jnp.clip(
        jnp.dot(emb, wn, preferred_element_type=jnp.float32), -1.0, 1.0)

    # ---- per-row margin on the label column (label == -1 rows skipped) ----
    meta = meta_ref[...]                                   # (B, 128) packed
    cos_m = meta[:, 0:1]                                   # (B, 1)
    sin_m = meta[:, 1:2]                                   # (B, 1)
    label = meta[:, 2:3].astype(jnp.int32)                 # (B, 1)
    col = lax.broadcasted_iota(jnp.int32, cos_t.shape, 1) + j * TILE_N
    hit = jnp.logical_and(col == label, label >= 0)

    # cos(acos(c) + m) = c*cos(m) - sqrt(1 - c^2)*sin(m)  (exact identity)
    sin_t = jnp.sqrt(jnp.maximum(1.0 - cos_t * cos_t, 0.0))
    shifted = cos_t * cos_m - sin_t * sin_m
    out_ref[...] = ARC_S * jnp.where(hit, shifted, cos_t)


def elastic_arcface_forward(embeddings, kernel, label, margin):
    b, f = embeddings.shape
    f2, n = kernel.shape
    assert f == f2
    npad = TILE_N * pl.cdiv(n, TILE_N)

    # zero-pad the class axis to a multiple of 128 (sliced back below)
    w_pad = jnp.zeros((f, npad), jnp.float32).at[:, :n].set(
        kernel.astype(jnp.float32))

    # pack label / cos(margin) / sin(margin) into a single (B, 128) buffer
    meta = jnp.zeros((b, 128), jnp.float32)
    meta = meta.at[:, 0].set(jnp.cos(margin).astype(jnp.float32))
    meta = meta.at[:, 1].set(jnp.sin(margin).astype(jnp.float32))
    meta = meta.at[:, 2].set(label.astype(jnp.float32))

    out = pl.pallas_call(
        elastic_arcface_kernel,
        out_shape=jax.ShapeDtypeStruct((b, npad), jnp.float32),
        grid=(npad // TILE_N,),
        in_specs=[
            pl.BlockSpec((b, f), lambda j: (0, 0)),        # embeddings
            pl.BlockSpec((f, TILE_N), lambda j: (0, j)),   # classifier tile
            pl.BlockSpec((b, 128), lambda j: (0, 0)),      # packed metadata
        ],
        out_specs=pl.BlockSpec((b, TILE_N), lambda j: (0, j)),
        compiler_params=pltpu.CompilerParams(
            dimension_semantics=("parallel",)),
    )(embeddings.astype(jnp.float32), w_pad, meta)
    return out[:, :n]


def elastic_arcface_reference(embeddings, kernel, label, margin):
    """Pure-JAX reference following the PyTorch forward literally (acos/cos path)."""
    embn = embeddings / jnp.linalg.norm(embeddings, axis=1, keepdims=True)
    wn = kernel / jnp.linalg.norm(kernel, axis=0, keepdims=True)
    cos_theta = jnp.clip(embn @ wn, -1.0, 1.0)
    theta = jnp.arccos(cos_theta)
    col = jnp.arange(kernel.shape[1])[None, :]
    hit = (col == label[:, None]) & (label[:, None] != -1)
    theta = theta + jnp.where(hit, margin[:, None], 0.0)
    return jnp.cos(theta) * ARC_S


if __name__ == "__main__":
    key = jax.random.PRNGKey(0)
    k_emb, k_w, k_lbl, k_m = jax.random.split(key, 4)

    embeddings = jax.random.normal(k_emb, (B, FEAT), jnp.float32)
    # nn.init.normal_(kernel, std=0.01), shape (in_features, out_features)
    arc_w = jax.random.normal(k_w, (FEAT, NCLASSES), jnp.float32) * 0.01
    label = jax.random.randint(k_lbl, (B,), 0, NCLASSES, jnp.int32)
    label = label.at[1].set(-1)  # exercise the label == -1 (no margin) path
    # margin ~ Normal(m, std), sampled per row (deterministic here)
    margin = ARC_M + ARC_STD * jax.random.normal(k_m, (B,), jnp.float32)

    logits = elastic_arcface_forward(embeddings, arc_w, label, margin)
    jax.block_until_ready(logits)

    ref = elastic_arcface_reference(embeddings, arc_w, label, margin)
    assert logits.shape == (B, NCLASSES)
    assert jnp.allclose(logits, ref, rtol=1e-2, atol=1e-2), (
        "mismatch vs reference:\n%s\n%s" % (logits, ref))

    print("KERNEL_OK")
</pallas_src>

<mosaic_0001>
module attributes {stable_mosaic.version = 11 : i64} {
  func.func @elastic_arcface_kernel(%arg0: i32, %arg1: memref<8x32xf32, #tpu.memory_space<vmem>>, %arg2: memref<32x128xf32, #tpu.memory_space<vmem>>, %arg3: memref<8x128xf32, #tpu.memory_space<vmem>>, %arg4: memref<8x128xf32, #tpu.memory_space<vmem>>) attributes {dimension_semantics = [#tpu.dimension_semantics<parallel>], iteration_bounds = array<i64: 2>, scalar_prefetch = 0 : i64, scratch_operands = 0 : i64, tpu.core_type = #tpu.core_type<tc>, window_params = [{pipeline_mode = #tpu.pipeline_mode<synchronous>, transform_indices = @transform_0, window_bounds = array<i64: 8, 32>}, {transform_indices = @transform_1, window_bounds = array<i64: 32, 128>}, {pipeline_mode = #tpu.pipeline_mode<synchronous>, transform_indices = @transform_2, window_bounds = array<i64: 8, 128>}, {transform_indices = @transform_3, window_bounds = array<i64: 8, 128>}]} {
    %c0 = arith.constant 0 : index
    %c0_0 = arith.constant 0 : index
    %0 = vector.load %arg1[%c0, %c0_0] : memref<8x32xf32, #tpu.memory_space<vmem>>, vector<8x32xf32>
    %1 = arith.mulf %0, %0 : vector<8x32xf32>
    %cst = arith.constant dense<0.000000e+00> : vector<8xf32>
    %2 = vector.multi_reduction <add>, %1, %cst [1] : vector<8x32xf32> to vector<8xf32>
    %3 = vector.shape_cast %2 : vector<8xf32> to vector<8x1xf32>
    %cst_1 = arith.constant 9.99999996E-13 : f32
    %4 = vector.broadcast %cst_1 : f32 to vector<8x1xf32>
    %5 = arith.addf %3, %4 : vector<8x1xf32>
    %6 = math.rsqrt %5 : vector<8x1xf32>
    %7 = vector.broadcast %6 : vector<8x1xf32> to vector<8x32xf32>
    %8 = arith.mulf %0, %7 : vector<8x32xf32>
    %c0_2 = arith.constant 0 : index
    %c0_3 = arith.constant 0 : index
    %9 = vector.load %arg2[%c0_2, %c0_3] : memref<32x128xf32, #tpu.memory_space<vmem>>, vector<32x128xf32>
    %10 = arith.mulf %9, %9 : vector<32x128xf32>
    %cst_4 = arith.constant dense<0.000000e+00> : vector<128xf32>
    %11 = vector.multi_reduction <add>, %10, %cst_4 [0] : vector<32x128xf32> to vector<128xf32>
    %12 = vector.shape_cast %11 : vector<128xf32> to vector<1x128xf32>
    %cst_5 = arith.constant 9.99999996E-13 : f32
    %13 = vector.broadcast %cst_5 : f32 to vector<1x128xf32>
    %14 = arith.addf %12, %13 : vector<1x128xf32>
    %15 = math.rsqrt %14 : vector<1x128xf32>
    %16 = vector.broadcast %15 : vector<1x128xf32> to vector<32x128xf32>
    %17 = arith.mulf %9, %16 : vector<32x128xf32>
    %cst_6 = arith.constant dense<0.000000e+00> : vector<8x128xf32>
    %18 = tpu.matmul %8, %17, %cst_6 {dimension_numbers = #tpu.dot_dimension_numbers<[1], [0], [0], [1], [0, 0, 1, 1], [], []>} : vector<8x32xf32>, vector<32x128xf32>, vector<8x128xf32> -> vector<8x128xf32>
    %cst_7 = arith.constant -1.000000e+00 : f32
    %cst_8 = arith.constant 1.000000e+00 : f32
    %19 = vector.broadcast %cst_7 : f32 to vector<8x128xf32>
    %20 = arith.maximumf %19, %18 : vector<8x128xf32>
    %21 = vector.broadcast %cst_8 : f32 to vector<8x128xf32>
    %22 = arith.minimumf %21, %20 : vector<8x128xf32>
    %c0_9 = arith.constant 0 : index
    %c0_10 = arith.constant 0 : index
    %23 = vector.load %arg3[%c0_9, %c0_10] : memref<8x128xf32, #tpu.memory_space<vmem>>, vector<8x128xf32>
    %24 = vector.extract_strided_slice %23 {offsets = [0, 0], sizes = [8, 1], strides = [1, 1]} : vector<8x128xf32> to vector<8x1xf32>
    %25 = vector.extract_strided_slice %23 {offsets = [0, 1], sizes = [8, 1], strides = [1, 1]} : vector<8x128xf32> to vector<8x1xf32>
    %26 = vector.extract_strided_slice %23 {offsets = [0, 2], sizes = [8, 1], strides = [1, 1]} : vector<8x128xf32> to vector<8x1xf32>
    %27 = arith.fptosi %26 : vector<8x1xf32> to vector<8x1xi32>
    %28 = tpu.iota {dimensions = array<i32: 1>} : vector<8x128xi32>
    %c128_i32 = arith.constant 128 : i32
    %29 = arith.muli %arg0, %c128_i32 : i32
    %30 = vector.broadcast %29 : i32 to vector<8x128xi32>
    %31 = arith.addi %28, %30 : vector<8x128xi32>
    %32 = vector.broadcast %27 : vector<8x1xi32> to vector<8x128xi32>
    %33 = arith.cmpi eq, %31, %32 : vector<8x128xi32>
    %c0_i32 = arith.constant 0 : i32
    %34 = vector.broadcast %c0_i32 : i32 to vector<8x1xi32>
    %35 = arith.cmpi sge, %27, %34 : vector<8x1xi32>
    %36 = vector.broadcast %35 : vector<8x1xi1> to vector<8x128xi1>
    %37 = arith.andi %33, %36 : vector<8x128xi1>
    %38 = arith.mulf %22, %22 : vector<8x128xf32>
    %cst_11 = arith.constant 1.000000e+00 : f32
    %39 = vector.broadcast %cst_11 : f32 to vector<8x128xf32>
    %40 = arith.subf %39, %38 : vector<8x128xf32>
    %cst_12 = arith.constant 0.000000e+00 : f32
    %41 = vector.broadcast %cst_12 : f32 to vector<8x128xf32>
    %42 = arith.maximumf %40, %41 : vector<8x128xf32>
    %43 = math.sqrt %42 : vector<8x128xf32>
    %44 = vector.broadcast %24 : vector<8x1xf32> to vector<8x128xf32>
    %45 = arith.mulf %22, %44 : vector<8x128xf32>
    %46 = vector.broadcast %25 : vector<8x1xf32> to vector<8x128xf32>
    %47 = arith.mulf %43, %46 : vector<8x128xf32>
    %48 = arith.subf %45, %47 : vector<8x128xf32>
    %49 = arith.select %37, %48, %22 : vector<8x128xi1>, vector<8x128xf32>
    %cst_13 = arith.constant 6.400000e+01 : f32
    %50 = vector.broadcast %cst_13 : f32 to vector<8x128xf32>
    %51 = arith.mulf %50, %49 : vector<8x128xf32>
    %c0_14 = arith.constant 0 : index
    %c0_15 = arith.constant 0 : index
    %52 = vector.load %arg4[%c0_14, %c0_15] : memref<8x128xf32, #tpu.memory_space<vmem>>, vector<8x128xf32>
    tpu.vector_store %arg4[%c0_14, %c0_15], %51 {strides = array<i32>} : memref<8x128xf32, #tpu.memory_space<vmem>>, vector<8x128xf32>,
    return
  }
  func.func @transform_0(%arg0: i32) -> (i32, i32) {
    %c0_i32 = arith.constant 0 : i32
    %c0_i32_0 = arith.constant 0 : i32
    %c0_i32_1 = arith.constant 0 : i32
    return %c0_i32, %c0_i32_0 : i32, i32
  }
  func.func @transform_1(%arg0: i32) -> (i32, i32) {
    %c0_i32 = arith.constant 0 : i32
    %c0_i32_0 = arith.constant 0 : i32
    return %c0_i32, %arg0 : i32, i32
  }
  func.func @transform_2(%arg0: i32) -> (i32, i32) {
    %c0_i32 = arith.constant 0 : i32
    %c0_i32_0 = arith.constant 0 : i32
    %c0_i32_1 = arith.constant 0 : i32
    return %c0_i32, %c0_i32_0 : i32, i32
  }
  func.func @transform_3(%arg0: i32) -> (i32, i32) {
    %c0_i32 = arith.constant 0 : i32
    %c0_i32_0 = arith.constant 0 : i32
    return %c0_i32, %arg0 : i32, i32
  }
}

</mosaic_0001>

<llo_original>
// kernel: tpu_custom_call.1
$region0: #{tpu_custom_call.1}
  #allocation0 [shape = 'u32[]', space=smem, size = 0x4, offset = 0x4, fixed_abs, tag = 'smem constant byte address 0x4 - core index']
  #allocation1 [shape = 'u32[144,128]{1,0:T(1,128)}', space=vmem, size = 0x12000, scoped, tag = 'internal scratch']
  %s0 = inlined_call_operand.hbm [shape: f32[8,32], index: 0, kind: input, shape index: {}]
  %s1 = inlined_call_operand.hbm [shape: f32[32,256], index: 1, kind: input, shape index: {}]
  %s2 = inlined_call_operand.hbm [shape: f32[8,128], index: 2, kind: input, shape index: {}]
  %s3 = inlined_call_operand.hbm [shape: f32[8,256], index: 3, kind: output, shape index: {}]
  %s4 = sld [smem:[#allocation0]]
  $region57: #{tpu_custom_call.1} parent=0
    _
  %s6 = ssub.s32 1, %s4
  %s7 = scalar_select 0, %s6, %s4
  $region1: #{tpu_custom_call.1} parent=0
    #allocation2 [shape = 'u8[4096]{0}', space=vmem, size = 0x1000, scoped, tag = 'input window, operand 0, single buffered']
    #allocation3 [shape = 's32[2]{0}', space=sflag, size = 0x8, scoped, tag = 'scoped memory for tpu_custom_call.1']
    #allocation4 [shape = 's32[2]{0}', space=sflag, size = 0x8, scoped, tag = 'scoped memory for tpu_custom_call.1']
    #allocation5 [shape = 'u8[32768]{0}', space=vmem, size = 0x8000, scoped, tag = 'input window, operand 1']
    #allocation6 [shape = 's32[2]{0}', space=sflag, size = 0x8, scoped, tag = 'scoped memory for tpu_custom_call.1']
    #allocation7 [shape = 'u8[4096]{0}', space=vmem, size = 0x1000, scoped, tag = 'input window, operand 2, single buffered']
    #allocation8 [shape = 'u8[8192]{0}', space=vmem, size = 0x2000, scoped, tag = 'output window, operand 0']
    %8 = vsyncpa [#allocation3], 0
    %9 = vsyncpa [#allocation6], 0
    %s10 = scalar_lea.sflag [#allocation6], 1
    %11 = vsyncpa %s10, 0
    %12 = vsyncpa [#allocation4], 0
    %s13 = scalar_lea.sflag [#allocation4], 1
    %14 = vsyncpa %s13, 0
    loop: start=0, step=1, limit=4
    $region2: #{tpu_custom_call.1} parent=1 // loop_pre_header
      _
    $region3: #{tpu_custom_call.1} parent=1 // loop_header
      %s16 = sphi 0, %s20
      %p17 = scmp.ge.s32.totalorder %s16, 4
      %s24 = sphi 0, %s24
      %s26 = sphi 0, %s24
      %s27 = sphi 0, %s26
      %s41 = sphi 0, %s27
      %s47 = sphi 0, %s49
      %s50 = sphi 0, %s47
      %s51 = sphi 0, %s50
      %s67 = sphi 0, %s51
      %s71 = sphi 0, %s71
      %s73 = sphi 0, %s71
      %s74 = sphi 0, %s73
      %s88 = sphi 0, %s74
      %s94 = sphi 0, %s96
      %s97 = sphi 0, %s94
      %s98 = sphi 0, %s97
      %s114 = sphi 0, %s98
    $region4: #{tpu_custom_call.1} parent=1 // loop_header_branch
      %19 = sbr.rel (%p17) target = $region8
    $region5: #{tpu_custom_call.1} parent=1 // loop_body
      %s21 = ssub.s32 %s16, 1
      %s22 = ssub.s32 %s16, 2
      %s23 = sadd.s32 %s16, 1
      %s25 = sadd.s32 %s24, 1
      %p28 = scmp.eq.s32.totalorder %s16, 1
      %p29 = scmp.ne.s32.totalorder %s24, %s26
      %p30 = scmp.eq.s32.totalorder %s16, 0
      %p31 = por %p29, %p30
      %p32 = scmp.ne.s32.totalorder %s24, %s26
      %p33 = scmp.eq.s32.totalorder %s21, 1
      %p34 = por %p32, %p33
      %p35 = scmp.ne.s32.totalorder %s26, %s27
      %p36 = scmp.eq.s32.totalorder %s21, 0
      %p37 = por %p35, %p36
      %p38 = scmp.ne.s32.totalorder %s26, %s27
      %p39 = scmp.eq.s32.totalorder %s22, 1
      %p40 = por %p38, %p39
      %p42 = scmp.ne.s32.totalorder %s27, %s41
      %p43 = scmp.eq.s32.totalorder %s22, 0
      %p44 = por %p42, %p43
      %s45 = ssub.s32 %s16, %s23
      %p46 = scmp.eq.s32.totalorder %s45, 0
      %s48 = sadd.s32 %s47, 1
      %s49 = scalar_select %p46, %s47, %s48
      %p52 = pneg %p46
      %p53 = scmp.eq.s32.totalorder %s16, 1
      %p54 = por %p52, %p53
      %p55 = scmp.ne.s32.totalorder %s47, %s50
      %p56 = scmp.eq.s32.totalorder %s16, 0
      %p57 = por %p55, %p56
      %p58 = scmp.ne.s32.totalorder %s47, %s50
      %p59 = scmp.eq.s32.totalorder %s21, 1
      %p60 = por %p58, %p59
      %p61 = scmp.ne.s32.totalorder %s50, %s51
      %p62 = scmp.eq.s32.totalorder %s21, 0
      %p63 = por %p61, %p62
      %p64 = scmp.ne.s32.totalorder %s50, %s51
      %p65 = scmp.eq.s32.totalorder %s22, 1
      %p66 = por %p64, %p65
      %p68 = scmp.ne.s32.totalorder %s51, %s67
      %p69 = scmp.eq.s32.totalorder %s22, 0
      %p70 = por %p68, %p69
      %s72 = sadd.s32 %s71, 1
      %p75 = scmp.eq.s32.totalorder %s16, 1
      %p76 = scmp.ne.s32.totalorder %s71, %s73
      %p77 = scmp.eq.s32.totalorder %s16, 0
      %p78 = por %p76, %p77
      %p79 = scmp.ne.s32.totalorder %s71, %s73
      %p80 = scmp.eq.s32.totalorder %s21, 1
      %p81 = por %p79, %p80
      %p82 = scmp.ne.s32.totalorder %s73, %s74
      %p83 = scmp.eq.s32.totalorder %s21, 0
      %p84 = por %p82, %p83
      %p85 = scmp.ne.s32.totalorder %s73, %s74
      %p86 = scmp.eq.s32.totalorder %s22, 1
      %p87 = por %p85, %p86
      %p89 = scmp.ne.s32.totalorder %s74, %s88
      %p90 = scmp.eq.s32.totalorder %s22, 0
      %p91 = por %p89, %p90
      %s92 = ssub.s32 %s16, %s23
      %p93 = scmp.eq.s32.totalorder %s92, 0
      %s95 = sadd.s32 %s94, 1
      %s96 = scalar_select %p93, %s94, %s95
      %p99 = pneg %p93
      %p100 = scmp.eq.s32.totalorder %s16, 1
      %p101 = por %p99, %p100
      %p102 = scmp.ne.s32.totalorder %s94, %s97
      %p103 = scmp.eq.s32.totalorder %s16, 0
      %p104 = por %p102, %p103
      %p105 = scmp.ne.s32.totalorder %s94, %s97
      %p106 = scmp.eq.s32.totalorder %s21, 1
      %p107 = por %p105, %p106
      %p108 = scmp.ne.s32.totalorder %s97, %s98
      %p109 = scmp.eq.s32.totalorder %s21, 0
      %p110 = por %p108, %p109
      %p111 = scmp.ne.s32.totalorder %s97, %s98
      %p112 = scmp.eq.s32.totalorder %s22, 1
      %p113 = por %p111, %p112
      %p115 = scmp.ne.s32.totalorder %s98, %s114
      %p116 = scmp.eq.s32.totalorder %s22, 0
      %p117 = por %p115, %p116
      %p118 = scmp.le.s32.totalorder 1, %s16
      %p119 = scmp.lt.s32.totalorder %s16, 3
      %p120 = pnand %p118, %p119
      %p121 = pneg %p120
      // Predicated region
      $region9: #{tpu_custom_call.1} parent=5 // pred_check
        _
      $region10: #{tpu_custom_call.1} parent=5 // pred_check_branch
        %123 = sbr.rel (%p120) target = $region12
      $region11: #{tpu_custom_call.1} parent=5 // pred_region
        %s124 = ssub.s32 %s16, 1
        // Predicated region
        $region13: #{tpu_custom_call.1} parent=11 // pred_check
          %p125 = pneg %p37
        $region14: #{tpu_custom_call.1} parent=11 // pred_check_branch
          %127 = sbr.rel (%p125) target = $region16
        $region15: #{tpu_custom_call.1} parent=11 // pred_region
          %s129 = ssub.s32 128, 128
          %130 = vsyncadd [#allocation3], %s129
          %s132 = sshll.u32 [#allocation2], 4
          %s133 = int_to_ptr.vmem [resolvable:$true] %s132
          %135 = dma.hbm_to_vmem [thread:$0]  %s0, 128, %s133, [#allocation3]
        $region16: #{tpu_custom_call.1} parent=11 // pred_fallthru
          _
        // Predicated region
        $region17: #{tpu_custom_call.1} parent=11 // pred_check
          %p136 = pneg %p84
        $region18: #{tpu_custom_call.1} parent=11 // pred_check_branch
          %138 = sbr.rel (%p136) target = $region20
        $region19: #{tpu_custom_call.1} parent=11 // pred_region
          %s140 = ssub.s32 128, 128
          %141 = vsyncadd [#allocation6], %s140
          %s143 = sshll.u32 [#allocation7], 4
          %s144 = int_to_ptr.vmem [resolvable:$true] %s143
          %146 = dma.hbm_to_vmem [thread:$0]  %s2, 128, %s144, [#allocation6]
        $region20: #{tpu_custom_call.1} parent=11 // pred_fallthru
          _
      $region12: #{tpu_custom_call.1} parent=5 // pred_fallthru
        _
      %p147 = scmp.lt.s32.totalorder %s16, 2
      // Predicated region
      $region21: #{tpu_custom_call.1} parent=5 // pred_check
        %p148 = pneg %p147
      $region22: #{tpu_custom_call.1} parent=5 // pred_check_branch
        %150 = sbr.rel (%p148) target = $region24
      $region23: #{tpu_custom_call.1} parent=5 // pred_region
        // Predicated region
        $region25: #{tpu_custom_call.1} parent=23 // pred_check
          %p151 = pneg %p57
        $region26: #{tpu_custom_call.1} parent=23 // pred_check_branch
          %153 = sbr.rel (%p151) target = $region28
        $region27: #{tpu_custom_call.1} parent=23 // pred_region
          %s154 = sand.u32 %s16, 1
          %s155 = scalar_lea.sflag [#allocation6], %s154
          %s156 = sand.u32 %s47, 1
          %s157 = smul.addr %s156, 32
          %s158 = scalar_lea.vmem [#allocation5], %s157
          %s160 = ssub.s32 512, 512
          %161 = vsyncadd %s155, %s160
          %s162 = smul.addr %s16, 128
          %s163 = scalar_lea.hbm %s1, %s162
          %s164 = sshll.u32 %s158, 4
          %s165 = int_to_ptr.vmem [resolvable:$true] %s164
          %170 = dma.hbm_to_vmem [thread:$0]  %s163, 512, %s165, %s155, 256, 128, 8
        $region28: #{tpu_custom_call.1} parent=23 // pred_fallthru
          _
      $region24: #{tpu_custom_call.1} parent=5 // pred_fallthru
        _
      %p171 = scmp.le.s32.totalorder 1, %s16
      %p172 = scmp.lt.s32.totalorder %s16, 3
      %p173 = pnand %p171, %p172
      %p174 = pneg %p173
      // Predicated region
      $region29: #{tpu_custom_call.1} parent=5 // pred_check
        _
      $region30: #{tpu_custom_call.1} parent=5 // pred_check_branch
        %176 = sbr.rel (%p173) target = $region32
      $region31: #{tpu_custom_call.1} parent=5 // pred_region
        %s177 = ssub.s32 %s16, 1
        // Predicated region
        $region33: #{tpu_custom_call.1} parent=31 // pred_check
          %p178 = pneg %p37
        $region34: #{tpu_custom_call.1} parent=31 // pred_check_branch
          %180 = sbr.rel (%p178) target = $region36
        $region35: #{tpu_custom_call.1} parent=31 // pred_region
          %181 = dma.done [#allocation3], 128
        $region36: #{tpu_custom_call.1} parent=31 // pred_fallthru
          _
        %s182 = sand.u32 %s21, 1
        %s183 = scalar_lea.sflag [#allocation6], %s182
        %s184 = sand.u32 %s50, 1
        %s185 = smul.addr %s184, 32
        %s186 = scalar_lea.vmem [#allocation5], %s185
        // Predicated region
        $region37: #{tpu_custom_call.1} parent=31 // pred_check
          %p187 = pneg %p63
        $region38: #{tpu_custom_call.1} parent=31 // pred_check_branch
          %189 = sbr.rel (%p187) target = $region40
        $region39: #{tpu_custom_call.1} parent=31 // pred_region
          %190 = dma.done %s183, 512
        $region40: #{tpu_custom_call.1} parent=31 // pred_fallthru
          _
        // Predicated region
        $region41: #{tpu_custom_call.1} parent=31 // pred_check
          %p191 = pneg %p84
        $region42: #{tpu_custom_call.1} parent=31 // pred_check_branch
          %193 = sbr.rel (%p191) target = $region44
        $region43: #{tpu_custom_call.1} parent=31 // pred_region
          %194 = dma.done [#allocation6], 128
        $region44: #{tpu_custom_call.1} parent=31 // pred_fallthru
          _
        %p195 = pneg %p37
        %p196 = pneg %p34
        %s197 = sand.u32 %s21, 1
        %s198 = scalar_lea.sflag [#allocation6], %s197
        %s199 = sand.u32 %s50, 1
        %s200 = smul.addr %s199, 32
        %s201 = scalar_lea.vmem [#allocation5], %s200
        %p202 = pneg %p63
        %p203 = pneg %p60
        %p204 = pneg %p84
        %p205 = pneg %p81
        %p206 = pneg %p110
        %p207 = pneg %p107
        %s208 = sand.u32 %s97, 1
        %s209 = scalar_lea.sflag [#allocation4], %s208
        %s210 = sand.u32 %s97, 1
        %s211 = smul.addr %s210, 8
        %s212 = scalar_lea.vmem [#allocation8], %s211
        %v213 = vld [vmem:[#allocation2] sm:$0xff]
        %v214 = vmul.f32 %v213, %v213
        %vm215 = vcmask 261120
        %v216 = vsel %vm215, %v214, 0.0
        %217 = vadd.xlane.f32.xlu0 %v216
        %v218 = vpop.xlane.xlu0 %217
        %v219 = vadd.f32 %v218, 1e-12
        %v220 = vrsqrt.pop %v219
        %v221 = vmul.f32 %v213, %v220
        %v222 = vld [vmem:[%s186] sm:$0xff]
        %v223 = vld [vmem:[%s186 + $0x8] sm:$0xff]
        %v224 = vld [vmem:[%s186 + $0x10] sm:$0xff]
        %v225 = vld [vmem:[%s186 + $0x18] sm:$0xff]
        %v226 = vmul.f32 %v222, %v222
        %v227 = vmul.f32 %v223, %v223
        %v228 = vmul.f32 %v224, %v224
        %v229 = vmul.f32 %v225, %v225
        %v230 = vadd.f32 %v226, %v227
        %v231 = vadd.f32 %v230, %v228
        %v232 = vadd.f32 %v231, %v229
        %v233 = vrot.slane %v232, 4
        %v234 = vadd.f32 %v232, %v233
        %v235 = vrot.slane %v234, 2
        %v236 = vadd.f32 %v234, %v235
        %v237 = vrot.slane %v236, 1
        %v238 = vadd.f32 %v236, %v237
        %v239 = vadd.f32 %v238, 1e-12
        %v240 = vrsqrt.pop %v239
        %v241 = vmul.f32 %v222, %v240
        %v242 = vmul.f32 %v223, %v240
        %v243 = vmul.f32 %v224, %v240
        %v244 = vmul.f32 %v225, %v240
        %v246 = vsel %vm215, %v221, 0
        %248 = vmatprep.subr.mxu0 0.0
        %249 = vmatpush1.msra.mxu0 0.0
        %250 = vmatprep.subr.mxu0 0.0
        %251 = vmatpush1.msra.mxu0 0.0
        %252 = vmatprep.subr.mxu0 0.0
        %253 = vmatpush1.msra.mxu0 0.0
        %254 = vmatprep.subr.mxu0 0.0
        %255 = vmatpush1.msra.mxu0 0.0
        %256 = vmatprep.subr.mxu0 0.0
        %257 = vmatpush1.msra.mxu0 0.0
        %258 = vmatprep.subr.mxu0 0.0
        %259 = vmatpush1.msra.mxu0 0.0
        %260 = vmatprep.subr.mxu0 0.0
        %261 = vmatpush1.msra.mxu0 0.0
        %262 = vmatprep.subr.mxu0 0.0
        %263 = vmatpush1.msra.mxu0 0.0
        %264 = vmatprep.subr.mxu0 0.0
        %265 = vmatpush1.msra.mxu0 0.0
        %266 = vmatprep.subr.mxu0 0.0
        %267 = vmatpush1.msra.mxu0 0.0
        %268 = vmatprep.subr.mxu0 0.0
        %269 = vmatpush1.msra.mxu0 0.0
        %270 = vmatprep.subr.mxu0 0.0
        %271 = vmatpush1.msra.mxu0 0.0
        %272 = vmatprep.subr.mxu0 0.0
        %273 = vmatpush1.msra.mxu0 %v244
        %274 = vmatprep.subr.mxu0 0.0
        %275 = vmatpush1.msra.mxu0 %v243
        %276 = vmatprep.subr.mxu0 0.0
        %277 = vmatpush1.msra.mxu0 %v242
        %278 = vmatprep.subr.mxu0 0.0
        %279 = vmatpush1.msra.mxu0 %v241
        %280 = vmatprep.subr.mxu0 0.0
        %281 = vmatpush2.msra.mxu0 0.0
        %282 = vmatprep.subr.mxu0 0.0
        %283 = vmatpush2.msra.mxu0 0.0
        %284 = vmatprep.subr.mxu0 0.0
        %285 = vmatpush2.msra.mxu0 0.0
        %286 = vmatprep.subr.mxu0 0.0
        %287 = vmatpush2.msra.mxu0 0.0
        %288 = vmatprep.subr.mxu0 0.0
        %289 = vmatpush2.msra.mxu0 0.0
        %290 = vmatprep.subr.mxu0 0.0
        %291 = vmatpush2.msra.mxu0 0.0
        %292 = vmatprep.subr.mxu0 0.0
        %293 = vmatpush2.msra.mxu0 0.0
        %294 = vmatprep.subr.mxu0 0.0
        %295 = vmatpush2.msra.mxu0 0.0
        %296 = vmatprep.subr.mxu0 0.0
        %297 = vmatpush2.msra.mxu0 0.0
        %298 = vmatprep.subr.mxu0 0.0
        %299 = vmatpush2.msra.mxu0 0.0
        %300 = vmatprep.subr.mxu0 0.0
        %301 = vmatpush2.msra.mxu0 0.0
        %302 = vmatprep.subr.mxu0 0.0
        %303 = vmatpush2.msra.mxu0 0.0
        %304 = vmatprep.subr.mxu0 0.0
        %305 = vmatpush2.msra.mxu0 0.0
        %306 = vmatprep.subr.mxu0 0.0
        %307 = vmatpush2.msra.mxu0 0.0
        %308 = vmatprep.subr.mxu0 0.0
        %309 = vmatpush2.msra.mxu0 0.0
        %310 = vmatprep.subr.mxu0 0.0
        %311 = vmatpush2.msra.mxu0 0.0
        %312 = vmatprep.mubr.f32.mxu0 0.0
        %313 = vmatmul.mubr.f32.gmra.mxu0 %v246
        %v314 = vpop.f32.mrf.mxu0
        %v315 = vadd.f32 0.0, %v314
        %v316 = vpop.f32.mrf.mxu0
        %317 = vdwg.mxu0
        %v318 = vmax.f32 %v315, -1.0
        %v319 = vmin.f32 %v318, 1.0
        %v320 = vld [vmem:[#allocation7] sm:$0xff]
        %v321 = vcvt.f32.s32.to.zero.pseudo %v320
        %v322 = vlaneseq
        %v323 = vand.u32 %v322, 127
        %s324 = smul.u32 %s21, 128
        %v325 = vstv %s324
        %v326 = vadd.s32 %v323, %v325
        %327 = vset.pattern.permute.xlu0 2
        %328 = vperm.xlu0 %327, %v321
        %v329 = vpop.permute.xlu0 %328
        %vm330 = vcmp.eq.s32.totalorder %v326, %v329
        %vm331 = vcmp.ge.s32.totalorder %v321, 0
        %v332 = vsel %vm331, 1, 0
        %333 = vset.pattern.permute.xlu0 2
        %334 = vperm.xlu0 %333, %v332
        %v335 = vpop.permute.xlu0 %334
        %vm336 = vcmp.eq.s32.totalorder %v335, 1
        %vm337 = vmand %vm330, %vm336
        %v338 = vmul.f32 %v319, %v319
        %v339 = vsub.f32 1.0, %v338
        %v340 = vmax.f32 %v339, 0.0
        %v341 = vrsqrt.pop %v340
        %v342 = vmul.f32 %v340, %v341
        %vm343 = vcmp.eq.f32.partialorder %v340, inf
        %v344 = vsel %vm343, %v340, %v342
        %vm345 = vcmp.eq.f32.partialorder %v340, 0.0
        %v346 = vand.u32 %v340, 2147483648
        %v347 = vsel %vm345, %v346, %v344
        %349 = vset.pattern.permute.xlu0 0
        %350 = vperm.xlu0 %349, %v320
        %v351 = vpop.permute.xlu0 %350
        %v353 = vmul.f32 %v319, %v351
        %354 = vset.pattern.permute.xlu0 1
        %355 = vperm.xlu0 %354, %v320
        %v356 = vpop.permute.xlu0 %355
        %v358 = vmul.f32 %v347, %v356
        %v359 = vsub.f32 %v353, %v358
        %v360 = vsel %vm337, %v359, %v319
        %v361 = vmul.f32 %v360, 64.0
        %362 = vst [vmem:[%s212] sm:$0xff] %v361
        %s363 = sand.u32 %s97, 1
        %s364 = scalar_lea.sflag [#allocation4], %s363
        %s365 = sand.u32 %s97, 1
        %s366 = smul.addr %s365, 8
        %s367 = scalar_lea.vmem [#allocation8], %s366
        // Predicated region
        $region45: #{tpu_custom_call.1} parent=31 // pred_check
          %p368 = pneg %p107
        $region46: #{tpu_custom_call.1} parent=31 // pred_check_branch
          %370 = sbr.rel (%p368) target = $region48
        $region47: #{tpu_custom_call.1} parent=31 // pred_region
          %s372 = ssub.s32 128, 128
          %373 = vsyncadd %s364, %s372
          %s374 = smul.addr %s21, 128
          %s375 = scalar_lea.hbm %s3, %s374
          %s377 = sshll.u32 %s367, 4
          %s378 = int_to_ptr.vmem [resolvable:$true] %s377
          %380 = dma.vmem_to_hbm [thread:$0]  %s378, 128, %s375, %s364
        $region48: #{tpu_custom_call.1} parent=31 // pred_fallthru
          _
      $region32: #{tpu_custom_call.1} parent=5 // pred_fallthru
        _
      %p381 = scmp.le.s32.totalorder 2, %s16
      // Predicated region
      $region49: #{tpu_custom_call.1} parent=5 // pred_check
        %p382 = pneg %p381
      $region50: #{tpu_custom_call.1} parent=5 // pred_check_branch
        %384 = sbr.rel (%p382) target = $region52
      $region51: #{tpu_custom_call.1} parent=5 // pred_region
        %s385 = ssub.s32 %s16, 2
        // Predicated region
        $region53: #{tpu_custom_call.1} parent=51 // pred_check
          %p386 = pneg %p113
        $region54: #{tpu_custom_call.1} parent=51 // pred_check_branch
          %388 = sbr.rel (%p386) target = $region56
        $region55: #{tpu_custom_call.1} parent=51 // pred_region
          %s389 = sand.u32 %s98, 1
          %s390 = scalar_lea.sflag [#allocation4], %s389
          %s391 = sand.u32 %s98, 1
          %s392 = smul.addr %s391, 8
          %s393 = scalar_lea.vmem [#allocation8], %s392
          %394 = dma.done %s390, 128
        $region56: #{tpu_custom_call.1} parent=51 // pred_fallthru
          _
      $region52: #{tpu_custom_call.1} parent=5 // pred_fallthru
        _
    $region6: #{tpu_custom_call.1} parent=1 // loop_footer
      %s20 = sadd.s32 1, %s16
    $region7: #{tpu_custom_call.1} parent=1 // loop_footer_branch
      %15 = sbr.rel target = $region3
    $region8: #{tpu_custom_call.1} parent=1 // loop_exit
      _
    %395 = vsyncpa [#allocation3], 1
    %s396 = scalar_lea.sflag [#allocation3], 1
    %397 = vsyncpa %s396, 1
    %398 = vsyncpa [#allocation6], 1
    %s399 = scalar_lea.sflag [#allocation6], 1
    %400 = vsyncpa %s399, 1
    %401 = vsyncpa [#allocation4], 1
    %s402 = scalar_lea.sflag [#allocation4], 1
    %403 = vsyncpa %s402, 1

</llo_original>
